<compile_context>
chip_gen: v7x
topology: tpu7x:2x2x1
jax: 0.10.0
libtpu: 0.0.40
codegen_flags: <defaults>
</compile_context>

<pallas_src>
import functools
import math

import jax
import jax.numpy as jnp
from jax import lax
from jax.experimental import pallas as pl
from jax.experimental.pallas import tpu as pltpu


def _make_kernel(batch: int, seq_half: int, embed_dim: int,
                 num_heads: int, head_dim: int):
    B, T, E, H, Dh = batch, seq_half, embed_dim, num_heads, head_dim
    BT = B * T

    def kernel(x_ref, wqkv_ref, bqkv_ref, wo_ref, bo_ref, wff_ref, bff_ref,
               y_ref):
        x = x_ref[...]                                # (B, S, E)
        x1 = x[:, :T, :].reshape(BT, E)               # torch x.chunk(2, 1)[0]
        x2 = x[:, T:, :].reshape(BT, E)               # torch x.chunk(2, 1)[1]

        # Fused QKV projection, batched over both batch elements.
        # Softmax scale is pre-folded into the Q columns of wqkv/bqkv.
        qkv = jnp.dot(x2, wqkv_ref[...],
                      preferred_element_type=jnp.float32) + bqkv_ref[0]
        q = qkv[:, 0:E]
        k = qkv[:, E:2 * E]
        v = qkv[:, 2 * E:3 * E]

        # q @ k^T via contracting last dims (no explicit transpose).
        qk_dims = (((1,), (1,)), ((), ()))

        # Per-(batch, head) attention (softmax must not mix batch elements).
        # Heads are concatenated along lanes, batches along sublanes, so the
        # output projection below is one (B*T, E) @ (E, E) matmul.
        o_rows = []
        for b in range(B):                            # static unroll (B small)
            rows = slice(b * T, (b + 1) * T)
            heads = []
            for h in range(H):                        # static unroll (H small)
                cols = slice(h * Dh, (h + 1) * Dh)
                qh = q[rows, cols]                    # (T, Dh) -- pre-scaled
                kh = k[rows, cols]
                vh = v[rows, cols]
                s = lax.dot_general(qh, kh, qk_dims,
                                    preferred_element_type=jnp.float32)  # (T,T)
                s = s - jnp.max(s, axis=-1, keepdims=True)
                p = jnp.exp(s)
                inv = pl.reciprocal(jnp.sum(p, axis=-1, keepdims=True),
                                    approx=False)     # exact (1e-5 tolerance)
                heads.append(
                    jnp.dot(p, vh, preferred_element_type=jnp.float32) * inv)
            o_rows.append(jnp.concatenate(heads, axis=-1))   # (T, E) lane concat
        o = jnp.concatenate(o_rows, axis=0)                  # (B*T, E)

        # Output projection + residual + feed-forward, all batched over B.
        y1 = x1 + jnp.dot(o, wo_ref[...],
                          preferred_element_type=jnp.float32) + bo_ref[0]
        ff = jnp.dot(y1, wff_ref[...],
                     preferred_element_type=jnp.float32) + bff_ref[0]
        y2 = x2 + ff

        # Assemble the full output tile in registers; single store.
        y = jnp.concatenate([y1.reshape(B, T, E), y2.reshape(B, T, E)], axis=1)
        y_ref[...] = y.astype(y_ref.dtype)

    return kernel


def reversible_attention(x, params, *, num_heads: int):
    """x: [B, S, E] (S even). Returns [B, S, E] = cat(y1, y2, axis=1)."""
    B, S, E = x.shape
    assert S % 2 == 0 and E % num_heads == 0
    T = S // 2
    head_dim = E // num_heads

    kernel = _make_kernel(B, T, E, num_heads, head_dim)

    # Advisory cost estimate (5 matmuls + softmax transcendentals).
    flops = (2 * B * T * E * (3 * E)                 # fused QKV
             + B * num_heads * 4 * T * T * head_dim  # scores + p@v
             + 2 * B * T * E * E                     # output projection
             + 2 * B * T * E * E)                    # feed-forward
    transcendentals = B * num_heads * T * (T + 1)    # exp + reciprocal
    bytes_accessed = 4 * (2 * B * S * E              # x in, y out
                          + E * 3 * E + 3 * E        # wqkv, bqkv
                          + 2 * (E * E + E))         # wo/bo, wff/bff

    vmem_spec = pl.BlockSpec(memory_space=pltpu.MemorySpace.VMEM)

    return pl.pallas_call(
        kernel,
        out_shape=jax.ShapeDtypeStruct((B, S, E), x.dtype),
        in_specs=[vmem_spec] * 7,
        out_specs=vmem_spec,
        cost_estimate=pl.CostEstimate(flops=flops,
                                      transcendentals=transcendentals,
                                      bytes_accessed=bytes_accessed),
    )(x,
      params["wqkv_t"], params["bqkv"],
      params["wo_t"], params["bo"],
      params["wff_t"], params["bff"])


# ----------------------------------------------------------------------------
# Parameters (torch-convention) and one-time packing into kernel layout.
# ----------------------------------------------------------------------------
def init_params(key, embed_dim: int):
    """Raw torch-style params: nn.MultiheadAttention + nn.Linear shapes."""
    E = embed_dim
    keys = jax.random.split(key, 6)
    bound = 1.0 / math.sqrt(E)

    def u(k, shape):
        return jax.random.uniform(k, shape, jnp.float32, -bound, bound)

    return {
        "in_proj_weight": u(keys[0], (3 * E, E)),   # [Wq; Wk; Wv]
        "in_proj_bias": u(keys[1], (3 * E,)),
        "out_proj_weight": u(keys[2], (E, E)),
        "out_proj_bias": u(keys[3], (E,)),
        "ff_weight": u(keys[4], (E, E)),
        "ff_bias": u(keys[5], (E,)),
    }


def pack_params(raw, num_heads: int):
    """Pre-transpose to x@W form, fuse QKV, fold 1/sqrt(head_dim) into Q."""
    E = raw["out_proj_weight"].shape[0]
    head_dim = E // num_heads
    scale = 1.0 / math.sqrt(head_dim)

    wqkv_t = raw["in_proj_weight"].T                 # (E, 3E) -> [q | k | v]
    wqkv_t = wqkv_t.at[:, :E].multiply(scale)
    bqkv = raw["in_proj_bias"]
    bqkv = bqkv.at[:E].multiply(scale)

    return {
        "wqkv_t": wqkv_t,
        "bqkv": bqkv.reshape(1, 3 * E),
        "wo_t": raw["out_proj_weight"].T,
        "bo": raw["out_proj_bias"].reshape(1, E),
        "wff_t": raw["ff_weight"].T,
        "bff": raw["ff_bias"].reshape(1, E),
    }


# ----------------------------------------------------------------------------
# Pure-JAX reference (torch.nn.MultiheadAttention semantics, raw params).
# ----------------------------------------------------------------------------
def reference(x, raw, *, num_heads: int):
    B, S, E = x.shape
    T = S // 2
    head_dim = E // num_heads
    x1, x2 = x[:, :T, :], x[:, T:, :]

    w_in, b_in = raw["in_proj_weight"], raw["in_proj_bias"]
    q = x2 @ w_in[:E].T + b_in[:E]
    k = x2 @ w_in[E:2 * E].T + b_in[E:2 * E]
    v = x2 @ w_in[2 * E:].T + b_in[2 * E:]

    def split_heads(t):  # (B, T, E) -> (B, H, T, Dh)
        return t.reshape(B, T, num_heads, head_dim).transpose(0, 2, 1, 3)

    qh, kh, vh = split_heads(q), split_heads(k), split_heads(v)
    s = jnp.einsum("bhqd,bhkd->bhqk", qh, kh) / math.sqrt(head_dim)
    p = jax.nn.softmax(s, axis=-1)
    o = jnp.einsum("bhqk,bhkd->bhqd", p, vh)
    o = o.transpose(0, 2, 1, 3).reshape(B, T, E)
    attn_out = o @ raw["out_proj_weight"].T + raw["out_proj_bias"]

    y1 = x1 + attn_out
    y2 = x2 + (y1 @ raw["ff_weight"].T + raw["ff_bias"])
    return jnp.concatenate([y1, y2], axis=1)


if __name__ == "__main__":
    # Module config: seq_len (== embed_dim of the MHA / linear width) = 32, heads = 2.
    EMBED = 32
    NUM_HEADS = 2
    B = 2
    S = 16              # token axis length (chunked in half: T = 8)

    key = jax.random.PRNGKey(0)
    kx, kp = jax.random.split(key)
    x = jax.random.normal(kx, (B, S, EMBED), jnp.float32)
    raw_params = init_params(kp, EMBED)
    packed = pack_params(raw_params, NUM_HEADS)

    fn = functools.partial(reversible_attention, num_heads=NUM_HEADS)
    out = jax.jit(fn)(x, packed)
    out = jax.block_until_ready(out)

    ref = reference(x, raw_params, num_heads=NUM_HEADS)
    assert out.shape == (B, S, EMBED)
    assert jnp.allclose(out, ref, atol=1e-5, rtol=1e-5), "mismatch vs reference"

    # TODO(synk): ReversibleAttention.reverse() (inverse pass) is not kernelized;
    # only the forward pass is implemented.
    print("KERNEL_OK")
</pallas_src>

<mosaic_0001>
module attributes {stable_mosaic.version = 11 : i64} {
  func.func @kernel(%arg0: memref<2x16x32xf32, #tpu.memory_space<vmem>>, %arg1: memref<32x96xf32, #tpu.memory_space<vmem>>, %arg2: memref<1x96xf32, #tpu.memory_space<vmem>>, %arg3: memref<32x32xf32, #tpu.memory_space<vmem>>, %arg4: memref<1x32xf32, #tpu.memory_space<vmem>>, %arg5: memref<32x32xf32, #tpu.memory_space<vmem>>, %arg6: memref<1x32xf32, #tpu.memory_space<vmem>>, %arg7: memref<2x16x32xf32, #tpu.memory_space<vmem>>) attributes {dimension_semantics = [], scalar_prefetch = 0 : i64, scratch_operands = 0 : i64, tpu.core_type = #tpu.core_type<tc>} {
    %c0 = arith.constant 0 : index
    %c0_0 = arith.constant 0 : index
    %c0_1 = arith.constant 0 : index
    %0 = vector.load %arg0[%c0, %c0_0, %c0_1] : memref<2x16x32xf32, #tpu.memory_space<vmem>>, vector<2x16x32xf32>
    %1 = vector.extract_strided_slice %0 {offsets = [0, 0, 0], sizes = [2, 8, 32], strides = [1, 1, 1]} : vector<2x16x32xf32> to vector<2x8x32xf32>
    %2 = vector.shape_cast %1 : vector<2x8x32xf32> to vector<16x32xf32>
    %3 = vector.extract_strided_slice %0 {offsets = [0, 8, 0], sizes = [2, 8, 32], strides = [1, 1, 1]} : vector<2x16x32xf32> to vector<2x8x32xf32>
    %4 = vector.shape_cast %3 : vector<2x8x32xf32> to vector<16x32xf32>
    %c0_2 = arith.constant 0 : index
    %c0_3 = arith.constant 0 : index
    %5 = vector.load %arg1[%c0_2, %c0_3] : memref<32x96xf32, #tpu.memory_space<vmem>>, vector<32x96xf32>
    %cst = arith.constant dense<0.000000e+00> : vector<16x96xf32>
    %6 = tpu.matmul %4, %5, %cst {dimension_numbers = #tpu.dot_dimension_numbers<[1], [0], [0], [1], [0, 0, 1, 1], [], []>} : vector<16x32xf32>, vector<32x96xf32>, vector<16x96xf32> -> vector<16x96xf32>
    %c0_4 = arith.constant 0 : index
    %c0_5 = arith.constant 0 : index
    %7 = vector.load %arg2[%c0_4, %c0_5] : memref<1x96xf32, #tpu.memory_space<vmem>>, vector<1x96xf32>
    %8 = vector.shape_cast %7 : vector<1x96xf32> to vector<96xf32>
    %9 = vector.shape_cast %8 : vector<96xf32> to vector<1x96xf32>
    %10 = vector.broadcast %9 : vector<1x96xf32> to vector<16x96xf32>
    %11 = arith.addf %6, %10 : vector<16x96xf32>
    %12 = vector.extract_strided_slice %11 {offsets = [0, 0], sizes = [16, 32], strides = [1, 1]} : vector<16x96xf32> to vector<16x32xf32>
    %13 = vector.extract_strided_slice %11 {offsets = [0, 32], sizes = [16, 32], strides = [1, 1]} : vector<16x96xf32> to vector<16x32xf32>
    %14 = vector.extract_strided_slice %11 {offsets = [0, 64], sizes = [16, 32], strides = [1, 1]} : vector<16x96xf32> to vector<16x32xf32>
    %15 = vector.extract_strided_slice %12 {offsets = [0, 0], sizes = [8, 16], strides = [1, 1]} : vector<16x32xf32> to vector<8x16xf32>
    %16 = vector.extract_strided_slice %13 {offsets = [0, 0], sizes = [8, 16], strides = [1, 1]} : vector<16x32xf32> to vector<8x16xf32>
    %17 = vector.extract_strided_slice %14 {offsets = [0, 0], sizes = [8, 16], strides = [1, 1]} : vector<16x32xf32> to vector<8x16xf32>
    %cst_6 = arith.constant dense<0.000000e+00> : vector<8x8xf32>
    %18 = tpu.matmul %15, %16, %cst_6 {dimension_numbers = #tpu.dot_dimension_numbers<[1], [1], [0], [0], [0, 0, 1, 0], [], []>} : vector<8x16xf32>, vector<8x16xf32>, vector<8x8xf32> -> vector<8x8xf32>
    %cst_7 = arith.constant dense<0xFF800000> : vector<8xf32>
    %19 = vector.multi_reduction <maximumf>, %18, %cst_7 [1] : vector<8x8xf32> to vector<8xf32>
    %20 = vector.shape_cast %19 : vector<8xf32> to vector<8x1xf32>
    %21 = vector.broadcast %20 : vector<8x1xf32> to vector<8x8xf32>
    %22 = arith.subf %18, %21 : vector<8x8xf32>
    %23 = math.exp %22 : vector<8x8xf32>
    %cst_8 = arith.constant dense<0.000000e+00> : vector<8xf32>
    %24 = vector.multi_reduction <add>, %23, %cst_8 [1] : vector<8x8xf32> to vector<8xf32>
    %25 = vector.shape_cast %24 : vector<8xf32> to vector<8x1xf32>
    %26 = tpu.reciprocal %25 : vector<8x1xf32> -> vector<8x1xf32>
    %cst_9 = arith.constant dense<0.000000e+00> : vector<8x16xf32>
    %27 = tpu.matmul %23, %17, %cst_9 {dimension_numbers = #tpu.dot_dimension_numbers<[1], [0], [0], [1], [0, 0, 1, 1], [], []>} : vector<8x8xf32>, vector<8x16xf32>, vector<8x16xf32> -> vector<8x16xf32>
    %28 = vector.broadcast %26 : vector<8x1xf32> to vector<8x16xf32>
    %29 = arith.mulf %27, %28 : vector<8x16xf32>
    %30 = vector.extract_strided_slice %12 {offsets = [0, 16], sizes = [8, 16], strides = [1, 1]} : vector<16x32xf32> to vector<8x16xf32>
    %31 = vector.extract_strided_slice %13 {offsets = [0, 16], sizes = [8, 16], strides = [1, 1]} : vector<16x32xf32> to vector<8x16xf32>
    %32 = vector.extract_strided_slice %14 {offsets = [0, 16], sizes = [8, 16], strides = [1, 1]} : vector<16x32xf32> to vector<8x16xf32>
    %cst_10 = arith.constant dense<0.000000e+00> : vector<8x8xf32>
    %33 = tpu.matmul %30, %31, %cst_10 {dimension_numbers = #tpu.dot_dimension_numbers<[1], [1], [0], [0], [0, 0, 1, 0], [], []>} : vector<8x16xf32>, vector<8x16xf32>, vector<8x8xf32> -> vector<8x8xf32>
    %cst_11 = arith.constant dense<0xFF800000> : vector<8xf32>
    %34 = vector.multi_reduction <maximumf>, %33, %cst_11 [1] : vector<8x8xf32> to vector<8xf32>
    %35 = vector.shape_cast %34 : vector<8xf32> to vector<8x1xf32>
    %36 = vector.broadcast %35 : vector<8x1xf32> to vector<8x8xf32>
    %37 = arith.subf %33, %36 : vector<8x8xf32>
    %38 = math.exp %37 : vector<8x8xf32>
    %cst_12 = arith.constant dense<0.000000e+00> : vector<8xf32>
    %39 = vector.multi_reduction <add>, %38, %cst_12 [1] : vector<8x8xf32> to vector<8xf32>
    %40 = vector.shape_cast %39 : vector<8xf32> to vector<8x1xf32>
    %41 = tpu.reciprocal %40 : vector<8x1xf32> -> vector<8x1xf32>
    %cst_13 = arith.constant dense<0.000000e+00> : vector<8x16xf32>
    %42 = tpu.matmul %38, %32, %cst_13 {dimension_numbers = #tpu.dot_dimension_numbers<[1], [0], [0], [1], [0, 0, 1, 1], [], []>} : vector<8x8xf32>, vector<8x16xf32>, vector<8x16xf32> -> vector<8x16xf32>
    %43 = vector.broadcast %41 : vector<8x1xf32> to vector<8x16xf32>
    %44 = arith.mulf %42, %43 : vector<8x16xf32>
    %45 = tpu.concatenate %29, %44 in 1 : vector<8x16xf32>, vector<8x16xf32> -> vector<8x32xf32>
    %46 = vector.extract_strided_slice %12 {offsets = [8, 0], sizes = [8, 16], strides = [1, 1]} : vector<16x32xf32> to vector<8x16xf32>
    %47 = vector.extract_strided_slice %13 {offsets = [8, 0], sizes = [8, 16], strides = [1, 1]} : vector<16x32xf32> to vector<8x16xf32>
    %48 = vector.extract_strided_slice %14 {offsets = [8, 0], sizes = [8, 16], strides = [1, 1]} : vector<16x32xf32> to vector<8x16xf32>
    %cst_14 = arith.constant dense<0.000000e+00> : vector<8x8xf32>
    %49 = tpu.matmul %46, %47, %cst_14 {dimension_numbers = #tpu.dot_dimension_numbers<[1], [1], [0], [0], [0, 0, 1, 0], [], []>} : vector<8x16xf32>, vector<8x16xf32>, vector<8x8xf32> -> vector<8x8xf32>
    %cst_15 = arith.constant dense<0xFF800000> : vector<8xf32>
    %50 = vector.multi_reduction <maximumf>, %49, %cst_15 [1] : vector<8x8xf32> to vector<8xf32>
    %51 = vector.shape_cast %50 : vector<8xf32> to vector<8x1xf32>
    %52 = vector.broadcast %51 : vector<8x1xf32> to vector<8x8xf32>
    %53 = arith.subf %49, %52 : vector<8x8xf32>
    %54 = math.exp %53 : vector<8x8xf32>
    %cst_16 = arith.constant dense<0.000000e+00> : vector<8xf32>
    %55 = vector.multi_reduction <add>, %54, %cst_16 [1] : vector<8x8xf32> to vector<8xf32>
    %56 = vector.shape_cast %55 : vector<8xf32> to vector<8x1xf32>
    %57 = tpu.reciprocal %56 : vector<8x1xf32> -> vector<8x1xf32>
    %cst_17 = arith.constant dense<0.000000e+00> : vector<8x16xf32>
    %58 = tpu.matmul %54, %48, %cst_17 {dimension_numbers = #tpu.dot_dimension_numbers<[1], [0], [0], [1], [0, 0, 1, 1], [], []>} : vector<8x8xf32>, vector<8x16xf32>, vector<8x16xf32> -> vector<8x16xf32>
    %59 = vector.broadcast %57 : vector<8x1xf32> to vector<8x16xf32>
    %60 = arith.mulf %58, %59 : vector<8x16xf32>
    %61 = vector.extract_strided_slice %12 {offsets = [8, 16], sizes = [8, 16], strides = [1, 1]} : vector<16x32xf32> to vector<8x16xf32>
    %62 = vector.extract_strided_slice %13 {offsets = [8, 16], sizes = [8, 16], strides = [1, 1]} : vector<16x32xf32> to vector<8x16xf32>
    %63 = vector.extract_strided_slice %14 {offsets = [8, 16], sizes = [8, 16], strides = [1, 1]} : vector<16x32xf32> to vector<8x16xf32>
    %cst_18 = arith.constant dense<0.000000e+00> : vector<8x8xf32>
    %64 = tpu.matmul %61, %62, %cst_18 {dimension_numbers = #tpu.dot_dimension_numbers<[1], [1], [0], [0], [0, 0, 1, 0], [], []>} : vector<8x16xf32>, vector<8x16xf32>, vector<8x8xf32> -> vector<8x8xf32>
    %cst_19 = arith.constant dense<0xFF800000> : vector<8xf32>
    %65 = vector.multi_reduction <maximumf>, %64, %cst_19 [1] : vector<8x8xf32> to vector<8xf32>
    %66 = vector.shape_cast %65 : vector<8xf32> to vector<8x1xf32>
    %67 = vector.broadcast %66 : vector<8x1xf32> to vector<8x8xf32>
    %68 = arith.subf %64, %67 : vector<8x8xf32>
    %69 = math.exp %68 : vector<8x8xf32>
    %cst_20 = arith.constant dense<0.000000e+00> : vector<8xf32>
    %70 = vector.multi_reduction <add>, %69, %cst_20 [1] : vector<8x8xf32> to vector<8xf32>
    %71 = vector.shape_cast %70 : vector<8xf32> to vector<8x1xf32>
    %72 = tpu.reciprocal %71 : vector<8x1xf32> -> vector<8x1xf32>
    %cst_21 = arith.constant dense<0.000000e+00> : vector<8x16xf32>
    %73 = tpu.matmul %69, %63, %cst_21 {dimension_numbers = #tpu.dot_dimension_numbers<[1], [0], [0], [1], [0, 0, 1, 1], [], []>} : vector<8x8xf32>, vector<8x16xf32>, vector<8x16xf32> -> vector<8x16xf32>
    %74 = vector.broadcast %72 : vector<8x1xf32> to vector<8x16xf32>
    %75 = arith.mulf %73, %74 : vector<8x16xf32>
    %76 = tpu.concatenate %60, %75 in 1 : vector<8x16xf32>, vector<8x16xf32> -> vector<8x32xf32>
    %77 = tpu.concatenate %45, %76 in 0 : vector<8x32xf32>, vector<8x32xf32> -> vector<16x32xf32>
    %c0_22 = arith.constant 0 : index
    %c0_23 = arith.constant 0 : index
    %78 = vector.load %arg3[%c0_22, %c0_23] : memref<32x32xf32, #tpu.memory_space<vmem>>, vector<32x32xf32>
    %cst_24 = arith.constant dense<0.000000e+00> : vector<16x32xf32>
    %79 = tpu.matmul %77, %78, %cst_24 {dimension_numbers = #tpu.dot_dimension_numbers<[1], [0], [0], [1], [0, 0, 1, 1], [], []>} : vector<16x32xf32>, vector<32x32xf32>, vector<16x32xf32> -> vector<16x32xf32>
    %80 = arith.addf %2, %79 : vector<16x32xf32>
    %c0_25 = arith.constant 0 : index
    %c0_26 = arith.constant 0 : index
    %81 = vector.load %arg4[%c0_25, %c0_26] : memref<1x32xf32, #tpu.memory_space<vmem>>, vector<1x32xf32>
    %82 = vector.shape_cast %81 : vector<1x32xf32> to vector<32xf32>
    %83 = vector.shape_cast %82 : vector<32xf32> to vector<1x32xf32>
    %84 = vector.broadcast %83 : vector<1x32xf32> to vector<16x32xf32>
    %85 = arith.addf %80, %84 : vector<16x32xf32>
    %c0_27 = arith.constant 0 : index
    %c0_28 = arith.constant 0 : index
    %86 = vector.load %arg5[%c0_27, %c0_28] : memref<32x32xf32, #tpu.memory_space<vmem>>, vector<32x32xf32>
    %cst_29 = arith.constant dense<0.000000e+00> : vector<16x32xf32>
    %87 = tpu.matmul %85, %86, %cst_29 {dimension_numbers = #tpu.dot_dimension_numbers<[1], [0], [0], [1], [0, 0, 1, 1], [], []>} : vector<16x32xf32>, vector<32x32xf32>, vector<16x32xf32> -> vector<16x32xf32>
    %c0_30 = arith.constant 0 : index
    %c0_31 = arith.constant 0 : index
    %88 = vector.load %arg6[%c0_30, %c0_31] : memref<1x32xf32, #tpu.memory_space<vmem>>, vector<1x32xf32>
    %89 = vector.shape_cast %88 : vector<1x32xf32> to vector<32xf32>
    %90 = vector.shape_cast %89 : vector<32xf32> to vector<1x32xf32>
    %91 = vector.broadcast %90 : vector<1x32xf32> to vector<16x32xf32>
    %92 = arith.addf %87, %91 : vector<16x32xf32>
    %93 = arith.addf %4, %92 : vector<16x32xf32>
    %94 = vector.shape_cast %85 : vector<16x32xf32> to vector<2x8x32xf32>
    %95 = vector.shape_cast %93 : vector<16x32xf32> to vector<2x8x32xf32>
    %96 = tpu.concatenate %94, %95 in 1 : vector<2x8x32xf32>, vector<2x8x32xf32> -> vector<2x16x32xf32>
    %c0_32 = arith.constant 0 : index
    %c0_33 = arith.constant 0 : index
    %c0_34 = arith.constant 0 : index
    %97 = vector.load %arg7[%c0_32, %c0_33, %c0_34] : memref<2x16x32xf32, #tpu.memory_space<vmem>>, vector<2x16x32xf32>
    tpu.vector_store %arg7[%c0_32, %c0_33, %c0_34], %96 {strides = array<i32>} : memref<2x16x32xf32, #tpu.memory_space<vmem>>, vector<2x16x32xf32>,
    return
  }
}

</mosaic_0001>

<llo_original>
// kernel: reversible_attention.1
$region0: #{reversible_attention.1}
  #allocation0 [shape = 'u32[]', space=smem, size = 0x4, offset = 0x4, fixed_abs, tag = 'smem constant byte address 0x4 - core index']
  #allocation1 [shape = 'u32[144,128]{1,0:T(1,128)}', space=vmem, size = 0x12000, scoped, tag = 'internal scratch']
  %s0 = inlined_call_operand.hbm [shape: f32[2,16,32], index: 0, kind: input, shape index: {}]
  %s1 = inlined_call_operand.hbm [shape: f32[32,96], index: 1, kind: input, shape index: {}]
  %s2 = inlined_call_operand.vmem [shape: f32[1,96], index: 2, kind: input, shape index: {}]
  %s3 = inlined_call_operand.hbm [shape: f32[32,32], index: 3, kind: input, shape index: {}]
  %s4 = inlined_call_operand.vmem [shape: f32[1,32], index: 4, kind: input, shape index: {}]
  %s5 = inlined_call_operand.hbm [shape: f32[32,32], index: 5, kind: input, shape index: {}]
  %s6 = inlined_call_operand.vmem [shape: f32[1,32], index: 6, kind: input, shape index: {}]
  %s7 = inlined_call_operand.hbm [shape: f32[2,16,32], index: 7, kind: output, shape index: {}]
  %s8 = sld [smem:[#allocation0]]
  $region54: #{reversible_attention.1} parent=0
    _
  %s10 = ssub.s32 1, %s8
  %s11 = scalar_select 0, %s10, %s8
  $region1: #{reversible_attention.1} parent=0
    #allocation2 [shape = 'u8[16384]{0}', space=vmem, size = 0x4000, scoped, tag = 'input window, operand 0, single buffered']
    #allocation3 [shape = 's32[1]{0}', space=sflag, size = 0x4, scoped, tag = 'scoped memory for reversible_attention.1']
    #allocation4 [shape = 's32[1]{0}', space=sflag, size = 0x4, scoped, tag = 'scoped memory for reversible_attention.1']
    #allocation5 [shape = 'u8[16384]{0}', space=vmem, size = 0x4000, scoped, tag = 'input window, operand 1, single buffered']
    #allocation6 [shape = 's32[1]{0}', space=sflag, size = 0x4, scoped, tag = 'scoped memory for reversible_attention.1']
    #allocation7 [shape = 'u8[16384]{0}', space=vmem, size = 0x4000, scoped, tag = 'input window, operand 3, single buffered']
    #allocation8 [shape = 'u8[16384]{0}', space=vmem, size = 0x4000, scoped, tag = 'input window, operand 5, single buffered']
    #allocation9 [shape = 's32[1]{0}', space=sflag, size = 0x4, scoped, tag = 'scoped memory for reversible_attention.1']
    #allocation10 [shape = 'u8[16384]{0}', space=vmem, size = 0x4000, scoped, tag = 'output window, operand 0, single buffered']
    %12 = vsyncpa [#allocation3], 0
    %13 = vsyncpa [#allocation6], 0
    %14 = vsyncpa [#allocation9], 0
    %15 = vsyncpa [#allocation4], 0
    // Predicated region
    $region2: #{reversible_attention.1} parent=1 // pred_check
      _
    $region3: #{reversible_attention.1} parent=1 // pred_check_branch
      %17 = sbr.rel (0) target = $region5
    $region4: #{reversible_attention.1} parent=1 // pred_region
      %s19 = ssub.s32 512, 512
      %20 = vsyncadd [#allocation3], %s19
      %s21 = sshll.u32 [#allocation2], 4
      %s22 = int_to_ptr.vmem [resolvable:$true] %s21
      %27 = dma.hbm_to_vmem [thread:$0]  %s0, 512, %s22, [#allocation3], 128, 128, 8
    $region5: #{reversible_attention.1} parent=1 // pred_fallthru
      _
    // Predicated region
    $region6: #{reversible_attention.1} parent=1 // pred_check
      _
    $region7: #{reversible_attention.1} parent=1 // pred_check_branch
      %29 = sbr.rel (0) target = $region9
    $region8: #{reversible_attention.1} parent=1 // pred_region
      %s31 = ssub.s32 512, 512
      %32 = vsyncadd [#allocation6], %s31
      %s33 = sshll.u32 [#allocation5], 4
      %s34 = int_to_ptr.vmem [resolvable:$true] %s33
      %39 = dma.hbm_to_vmem [thread:$0]  %s1, 512, %s34, [#allocation6], 128, 128, 8
    $region9: #{reversible_attention.1} parent=1 // pred_fallthru
      _
    // Predicated region
    $region10: #{reversible_attention.1} parent=1 // pred_check
      _
    $region11: #{reversible_attention.1} parent=1 // pred_check_branch
      %41 = sbr.rel (0) target = $region13
    $region12: #{reversible_attention.1} parent=1 // pred_region
      _
    $region13: #{reversible_attention.1} parent=1 // pred_fallthru
      _
    // Predicated region
    $region14: #{reversible_attention.1} parent=1 // pred_check
      _
    $region15: #{reversible_attention.1} parent=1 // pred_check_branch
      %43 = sbr.rel (0) target = $region17
    $region16: #{reversible_attention.1} parent=1 // pred_region
      %s45 = ssub.s32 512, 512
      %46 = vsyncadd [#allocation6], %s45
      %s47 = sshll.u32 [#allocation7], 4
      %s48 = int_to_ptr.vmem [resolvable:$true] %s47
      %53 = dma.hbm_to_vmem [thread:$0]  %s3, 512, %s48, [#allocation6], 128, 128, 8
    $region17: #{reversible_attention.1} parent=1 // pred_fallthru
      _
    // Predicated region
    $region18: #{reversible_attention.1} parent=1 // pred_check
      _
    $region19: #{reversible_attention.1} parent=1 // pred_check_branch
      %55 = sbr.rel (0) target = $region21
    $region20: #{reversible_attention.1} parent=1 // pred_region
      _
    $region21: #{reversible_attention.1} parent=1 // pred_fallthru
      _
    // Predicated region
    $region22: #{reversible_attention.1} parent=1 // pred_check
      _
    $region23: #{reversible_attention.1} parent=1 // pred_check_branch
      %57 = sbr.rel (0) target = $region25
    $region24: #{reversible_attention.1} parent=1 // pred_region
      %s59 = ssub.s32 512, 512
      %60 = vsyncadd [#allocation9], %s59
      %s61 = sshll.u32 [#allocation8], 4
      %s62 = int_to_ptr.vmem [resolvable:$true] %s61
      %67 = dma.hbm_to_vmem [thread:$0]  %s5, 512, %s62, [#allocation9], 128, 128, 8
    $region25: #{reversible_attention.1} parent=1 // pred_fallthru
      _
    // Predicated region
    $region26: #{reversible_attention.1} parent=1 // pred_check
      _
    $region27: #{reversible_attention.1} parent=1 // pred_check_branch
      %69 = sbr.rel (0) target = $region29
    $region28: #{reversible_attention.1} parent=1 // pred_region
      _
    $region29: #{reversible_attention.1} parent=1 // pred_fallthru
      _
    // Predicated region
    $region30: #{reversible_attention.1} parent=1 // pred_check
      _
    $region31: #{reversible_attention.1} parent=1 // pred_check_branch
      %71 = sbr.rel (0) target = $region33
    $region32: #{reversible_attention.1} parent=1 // pred_region
      %72 = dma.done [#allocation3], 512
    $region33: #{reversible_attention.1} parent=1 // pred_fallthru
      _
    // Predicated region
    $region34: #{reversible_attention.1} parent=1 // pred_check
      _
    $region35: #{reversible_attention.1} parent=1 // pred_check_branch
      %74 = sbr.rel (0) target = $region37
    $region36: #{reversible_attention.1} parent=1 // pred_region
      %75 = dma.done [#allocation6], 512
    $region37: #{reversible_attention.1} parent=1 // pred_fallthru
      _
    // Predicated region
    $region38: #{reversible_attention.1} parent=1 // pred_check
      _
    $region39: #{reversible_attention.1} parent=1 // pred_check_branch
      %77 = sbr.rel (0) target = $region41
    $region40: #{reversible_attention.1} parent=1 // pred_region
      %78 = dma.done [#allocation6], 512
    $region41: #{reversible_attention.1} parent=1 // pred_fallthru
      _
    // Predicated region
    $region42: #{reversible_attention.1} parent=1 // pred_check
      _
    $region43: #{reversible_attention.1} parent=1 // pred_check_branch
      %80 = sbr.rel (0) target = $region45
    $region44: #{reversible_attention.1} parent=1 // pred_region
      %81 = dma.done [#allocation9], 512
    $region45: #{reversible_attention.1} parent=1 // pred_fallthru
      _
    %v82 = vld [vmem:[#allocation2] sm:$0xff]
    %v83 = vld [vmem:[#allocation2 + $0x8] sm:$0xff]
    %v84 = vld [vmem:[#allocation2 + $0x10] sm:$0xff]
    %v85 = vld [vmem:[#allocation2 + $0x18] sm:$0xff]
    %v86 = vld [vmem:[#allocation5] sm:$0xff]
    %v87 = vld [vmem:[#allocation5 + $0x8] sm:$0xff]
    %v88 = vld [vmem:[#allocation5 + $0x10] sm:$0xff]
    %v89 = vld [vmem:[#allocation5 + $0x18] sm:$0xff]
    %v90 = vld [vmem:[%s2] sm:$0x1]
    %v92 = vlaneseq
    %v93 = vshrl.u32 %v92, 7
    %v94 = vsub.s32 0, %v93
    %v95 = vrot.slane %v90, %v94
    %vm97 = vcmask 261120
    %v99 = vsel %vm97, %v83, 0
    %v102 = vsel %vm97, %v85, 0
    %104 = vmatprep.subr.mxu0 0.0
    %105 = vmatpush1.msra.mxu0 %v86
    %106 = vmatprep.subr.mxu0 0.0
    %107 = vmatpush1.msra.mxu0 %v87
    %108 = vmatprep.subr.mxu0 0.0
    %109 = vmatpush1.msra.mxu0 %v88
    %110 = vmatprep.subr.mxu0 0.0
    %111 = vmatpush1.msra.mxu0 %v89
    %112 = vmatprep.subr.mxu0 0.0
    %113 = vmatpush1.msra.mxu0 0.0
    %114 = vmatprep.subr.mxu0 0.0
    %115 = vmatpush1.msra.mxu0 0.0
    %116 = vmatprep.subr.mxu0 0.0
    %117 = vmatpush1.msra.mxu0 0.0
    %118 = vmatprep.subr.mxu0 0.0
    %119 = vmatpush1.msra.mxu0 0.0
    %120 = vmatprep.subr.mxu0 0.0
    %121 = vmatpush1.msra.mxu0 0.0
    %122 = vmatprep.subr.mxu0 0.0
    %123 = vmatpush1.msra.mxu0 0.0
    %124 = vmatprep.subr.mxu0 0.0
    %125 = vmatpush1.msra.mxu0 0.0
    %126 = vmatprep.subr.mxu0 0.0
    %127 = vmatpush1.msra.mxu0 0.0
    %128 = vmatprep.subr.mxu0 0.0
    %129 = vmatpush1.msra.mxu0 0.0
    %130 = vmatprep.subr.mxu0 0.0
    %131 = vmatpush1.msra.mxu0 0.0
    %132 = vmatprep.subr.mxu0 0.0
    %133 = vmatpush1.msra.mxu0 0.0
    %134 = vmatprep.subr.mxu0 0.0
    %135 = vmatpush1.msra.mxu0 0.0
    %136 = vmatprep.subr.mxu0 0.0
    %137 = vmatpush1.msra.mxu0 0.0
    %138 = vmatprep.subr.mxu0 0.0
    %139 = vmatpush1.msra.mxu0 0.0
    %140 = vmatprep.subr.mxu0 0.0
    %141 = vmatpush1.msra.mxu0 0.0
    %142 = vmatprep.subr.mxu0 0.0
    %143 = vmatpush1.msra.mxu0 0.0
    %144 = vmatprep.subr.mxu0 0.0
    %145 = vmatpush1.msra.mxu0 0.0
    %146 = vmatprep.subr.mxu0 0.0
    %147 = vmatpush1.msra.mxu0 0.0
    %148 = vmatprep.subr.mxu0 0.0
    %149 = vmatpush1.msra.mxu0 0.0
    %150 = vmatprep.subr.mxu0 0.0
    %151 = vmatpush1.msra.mxu0 0.0
    %152 = vmatprep.subr.mxu0 0.0
    %153 = vmatpush1.msra.mxu0 0.0
    %154 = vmatprep.subr.mxu0 0.0
    %155 = vmatpush1.msra.mxu0 0.0
    %156 = vmatprep.subr.mxu0 0.0
    %157 = vmatpush1.msra.mxu0 0.0
    %158 = vmatprep.subr.mxu0 0.0
    %159 = vmatpush1.msra.mxu0 0.0
    %160 = vmatprep.subr.mxu0 0.0
    %161 = vmatpush1.msra.mxu0 0.0
    %162 = vmatprep.subr.mxu0 0.0
    %163 = vmatpush1.msra.mxu0 0.0
    %164 = vmatprep.subr.mxu0 0.0
    %165 = vmatpush1.msra.mxu0 0.0
    %166 = vmatprep.subr.mxu0 0.0
    %167 = vmatpush1.msra.mxu0 0.0
    %168 = vmatprep.mubr.f32.mxu0 0.0
    %169 = vmatmul.mubr.f32.gmra.mrb[0].mxu0 %v99
    %v170 = vpop.f32.mrb[0].mxu0
    %v171 = vadd.f32 %v95, %v170
    %v172 = vpop.f32.mrb[0].mxu0
    %173 = vmatprep.mubr.f32.mxu0 0.0
    %174 = vmatmul.mubr.f32.gmra.mrb[0].mxu0 %v102
    %v175 = vpop.f32.mrb[0].mxu0
    %v176 = vadd.f32 %v95, %v175
    %v177 = vpop.f32.mrb[0].mxu0
    %178 = vdwg.mxu0
    %180 = vrot.lane.b32.xlu0 %v171, 96
    %v181 = vpop.permute.xlu0 %180
    %vm182 = vcmask 130048
    %v183 = vsel %vm182, %v171, 0
    %v185 = vsel %vm182, %v181, 0
    %187 = vmatprep.subr.mxu0 0.0
    %188 = vmatpush1.xpose.msra.mxu0 %v185
    %189 = vmatprep.subr.mxu0 0.0
    %190 = vmatpush1.xpose.msra.mxu0 0.0
    %191 = vmatprep.subr.mxu0 0.0
    %192 = vmatpush1.xpose.msra.mxu0 0.0
    %193 = vmatprep.subr.mxu0 0.0
    %194 = vmatpush1.xpose.msra.mxu0 0.0
    %195 = vmatprep.subr.mxu0 0.0
    %196 = vmatpush1.xpose.msra.mxu0 0.0
    %197 = vmatprep.subr.mxu0 0.0
    %198 = vmatpush1.xpose.msra.mxu0 0.0
    %199 = vmatprep.subr.mxu0 0.0
    %200 = vmatpush1.xpose.msra.mxu0 0.0
    %201 = vmatprep.subr.mxu0 0.0
    %202 = vmatpush1.xpose.msra.mxu0 0.0
    %203 = vmatprep.subr.mxu0 0.0
    %204 = vmatpush1.xpose.msra.mxu0 0.0
    %205 = vmatprep.subr.mxu0 0.0
    %206 = vmatpush1.xpose.msra.mxu0 0.0
    %207 = vmatprep.subr.mxu0 0.0
    %208 = vmatpush1.xpose.msra.mxu0 0.0
    %209 = vmatprep.subr.mxu0 0.0
    %210 = vmatpush1.xpose.msra.mxu0 0.0
    %211 = vmatprep.subr.mxu0 0.0
    %212 = vmatpush1.xpose.msra.mxu0 0.0
    %213 = vmatprep.subr.mxu0 0.0
    %214 = vmatpush1.xpose.msra.mxu0 0.0
    %215 = vmatprep.subr.mxu0 0.0
    %216 = vmatpush1.xpose.msra.mxu0 0.0
    %217 = vmatprep.subr.mxu0 0.0
    %218 = vmatpush1.xpose.msra.mxu0 0.0
    %219 = vmatprep.subr.mxu0 0.0
    %220 = vmatpush1.xpose.msra.mxu0 0.0
    %221 = vmatprep.subr.mxu0 0.0
    %222 = vmatpush1.xpose.msra.mxu0 0.0
    %223 = vmatprep.subr.mxu0 0.0
    %224 = vmatpush1.xpose.msra.mxu0 0.0
    %225 = vmatprep.subr.mxu0 0.0
    %226 = vmatpush1.xpose.msra.mxu0 0.0
    %227 = vmatprep.subr.mxu0 0.0
    %228 = vmatpush1.xpose.msra.mxu0 0.0
    %229 = vmatprep.subr.mxu0 0.0
    %230 = vmatpush1.xpose.msra.mxu0 0.0
    %231 = vmatprep.subr.mxu0 0.0
    %232 = vmatpush1.xpose.msra.mxu0 0.0
    %233 = vmatprep.subr.mxu0 0.0
    %234 = vmatpush1.xpose.msra.mxu0 0.0
    %235 = vmatprep.subr.mxu0 0.0
    %236 = vmatpush1.xpose.msra.mxu0 0.0
    %237 = vmatprep.subr.mxu0 0.0
    %238 = vmatpush1.xpose.msra.mxu0 0.0
    %239 = vmatprep.subr.mxu0 0.0
    %240 = vmatpush1.xpose.msra.mxu0 0.0
    %241 = vmatprep.subr.mxu0 0.0
    %242 = vmatpush1.xpose.msra.mxu0 0.0
    %243 = vmatprep.subr.mxu0 0.0
    %244 = vmatpush1.xpose.msra.mxu0 0.0
    %245 = vmatprep.subr.mxu0 0.0
    %246 = vmatpush1.xpose.msra.mxu0 0.0
    %247 = vmatprep.subr.mxu0 0.0
    %248 = vmatpush1.xpose.msra.mxu0 0.0
    %249 = vmatprep.subr.mxu0 0.0
    %250 = vmatpush1.xpose.msra.mxu0 0.0
    %251 = vmatprep.mubr.f32.mxu0 0.0
    %252 = vmatmul.mubr.f32.gmra.mrb[0].mxu0 %v183
    %v253 = vpop.f32.mrb[0].mxu0
    %v254 = vadd.f32 0.0, %v253
    %v255 = vpop.f32.mrb[0].mxu0
    %256 = vdwg.mxu0
    %vm257 = vcmask 64512
    %v258 = vsel %vm257, %v254, -inf
    %259 = vmax.xlane.f32.xlu0 %v258
    %v260 = vpop.xlane.xlu0 %259
    %v261 = vsub.f32 %v254, %v260
    %v262 = vmul.f32 %v261, 1.442695
    %v263 = vpow.pop %v262
    %v264 = vsel %vm257, %v263, 0.0
    %265 = vadd.xlane.f32.xlu0 %v264
    %v266 = vpop.xlane.xlu0 %265
    %v267 = vrcp.pop %v266
    %268 = vrot.lane.b32.xlu0 %v171, 64
    %v269 = vpop.permute.xlu0 %268
    %v272 = vsel %vm257, %v263, 0
    %274 = vmatprep.subr.mxu0 0.0
    %275 = vmatpush1.msra.mxu0 %v269
    %276 = vmatprep.subr.mxu0 0.0
    %277 = vmatpush1.msra.mxu0 0.0
    %278 = vmatprep.subr.mxu0 0.0
    %279 = vmatpush1.msra.mxu0 0.0
    %280 = vmatprep.subr.mxu0 0.0
    %281 = vmatpush1.msra.mxu0 0.0
    %282 = vmatprep.subr.mxu0 0.0
    %283 = vmatpush1.msra.mxu0 0.0
    %284 = vmatprep.subr.mxu0 0.0
    %285 = vmatpush1.msra.mxu0 0.0
    %286 = vmatprep.subr.mxu0 0.0
    %287 = vmatpush1.msra.mxu0 0.0
    %288 = vmatprep.subr.mxu0 0.0
    %289 = vmatpush1.msra.mxu0 0.0
    %290 = vmatprep.subr.mxu0 0.0
    %291 = vmatpush1.msra.mxu0 0.0
    %292 = vmatprep.subr.mxu0 0.0
    %293 = vmatpush1.msra.mxu0 0.0
    %294 = vmatprep.subr.mxu0 0.0
    %295 = vmatpush1.msra.mxu0 0.0
    %296 = vmatprep.subr.mxu0 0.0
    %297 = vmatpush1.msra.mxu0 0.0
    %298 = vmatprep.subr.mxu0 0.0
    %299 = vmatpush1.msra.mxu0 0.0
    %300 = vmatprep.subr.mxu0 0.0
    %301 = vmatpush1.msra.mxu0 0.0
    %302 = vmatprep.subr.mxu0 0.0
    %303 = vmatpush1.msra.mxu0 0.0
    %304 = vmatprep.subr.mxu0 0.0
    %305 = vmatpush1.msra.mxu0 0.0
    %306 = vmatprep.subr.mxu0 0.0
    %307 = vmatpush1.msra.mxu0 0.0
    %308 = vmatprep.subr.mxu0 0.0
    %309 = vmatpush1.msra.mxu0 0.0
    %310 = vmatprep.subr.mxu0 0.0
    %311 = vmatpush1.msra.mxu0 0.0
    %312 = vmatprep.subr.mxu0 0.0
    %313 = vmatpush1.msra.mxu0 0.0
    %314 = vmatprep.subr.mxu0 0.0
    %315 = vmatpush1.msra.mxu0 0.0
    %316 = vmatprep.subr.mxu0 0.0
    %317 = vmatpush1.msra.mxu0 0.0
    %318 = vmatprep.subr.mxu0 0.0
    %319 = vmatpush1.msra.mxu0 0.0
    %320 = vmatprep.subr.mxu0 0.0
    %321 = vmatpush1.msra.mxu0 0.0
    %322 = vmatprep.subr.mxu0 0.0
    %323 = vmatpush1.msra.mxu0 0.0
    %324 = vmatprep.subr.mxu0 0.0
    %325 = vmatpush1.msra.mxu0 0.0
    %326 = vmatprep.subr.mxu0 0.0
    %327 = vmatpush1.msra.mxu0 0.0
    %328 = vmatprep.subr.mxu0 0.0
    %329 = vmatpush1.msra.mxu0 0.0
    %330 = vmatprep.subr.mxu0 0.0
    %331 = vmatpush1.msra.mxu0 0.0
    %332 = vmatprep.subr.mxu0 0.0
    %333 = vmatpush1.msra.mxu0 0.0
    %334 = vmatprep.subr.mxu0 0.0
    %335 = vmatpush1.msra.mxu0 0.0
    %336 = vmatprep.subr.mxu0 0.0
    %337 = vmatpush1.msra.mxu0 0.0
    %338 = vmatprep.mubr.f32.mxu0 0.0
    %339 = vmatmul.mubr.f32.gmra.mrb[0].mxu0 %v272
    %v340 = vpop.f32.mrb[0].mxu0
    %v341 = vadd.f32 0.0, %v340
    %v342 = vpop.f32.mrb[0].mxu0
    %343 = vdwg.mxu0
    %v344 = vmul.f32 %v341, %v267
    %345 = vrot.lane.b32.xlu0 %v171, 112
    %v346 = vpop.permute.xlu0 %345
    %347 = vrot.lane.b32.xlu0 %v171, 80
    %v348 = vpop.permute.xlu0 %347
    %v349 = vsel %vm182, %v346, 0
    %v351 = vsel %vm182, %v348, 0
    %353 = vmatprep.subr.mxu0 0.0
    %354 = vmatpush1.xpose.msra.mxu0 %v351
    %355 = vmatprep.subr.mxu0 0.0
    %356 = vmatpush1.xpose.msra.mxu0 0.0
    %357 = vmatprep.subr.mxu0 0.0
    %358 = vmatpush1.xpose.msra.mxu0 0.0
    %359 = vmatprep.subr.mxu0 0.0
    %360 = vmatpush1.xpose.msra.mxu0 0.0
    %361 = vmatprep.subr.mxu0 0.0
    %362 = vmatpush1.xpose.msra.mxu0 0.0
    %363 = vmatprep.subr.mxu0 0.0
    %364 = vmatpush1.xpose.msra.mxu0 0.0
    %365 = vmatprep.subr.mxu0 0.0
    %366 = vmatpush1.xpose.msra.mxu0 0.0
    %367 = vmatprep.subr.mxu0 0.0
    %368 = vmatpush1.xpose.msra.mxu0 0.0
    %369 = vmatprep.subr.mxu0 0.0
    %370 = vmatpush1.xpose.msra.mxu0 0.0
    %371 = vmatprep.subr.mxu0 0.0
    %372 = vmatpush1.xpose.msra.mxu0 0.0
    %373 = vmatprep.subr.mxu0 0.0
    %374 = vmatpush1.xpose.msra.mxu0 0.0
    %375 = vmatprep.subr.mxu0 0.0
    %376 = vmatpush1.xpose.msra.mxu0 0.0
    %377 = vmatprep.subr.mxu0 0.0
    %378 = vmatpush1.xpose.msra.mxu0 0.0
    %379 = vmatprep.subr.mxu0 0.0
    %380 = vmatpush1.xpose.msra.mxu0 0.0
    %381 = vmatprep.subr.mxu0 0.0
    %382 = vmatpush1.xpose.msra.mxu0 0.0
    %383 = vmatprep.subr.mxu0 0.0
    %384 = vmatpush1.xpose.msra.mxu0 0.0
    %385 = vmatprep.subr.mxu0 0.0
    %386 = vmatpush1.xpose.msra.mxu0 0.0
    %387 = vmatprep.subr.mxu0 0.0
    %388 = vmatpush1.xpose.msra.mxu0 0.0
    %389 = vmatprep.subr.mxu0 0.0
    %390 = vmatpush1.xpose.msra.mxu0 0.0
    %391 = vmatprep.subr.mxu0 0.0
    %392 = vmatpush1.xpose.msra.mxu0 0.0
    %393 = vmatprep.subr.mxu0 0.0
    %394 = vmatpush1.xpose.msra.mxu0 0.0
    %395 = vmatprep.subr.mxu0 0.0
    %396 = vmatpush1.xpose.msra.mxu0 0.0
    %397 = vmatprep.subr.mxu0 0.0
    %398 = vmatpush1.xpose.msra.mxu0 0.0
    %399 = vmatprep.subr.mxu0 0.0
    %400 = vmatpush1.xpose.msra.mxu0 0.0
    %401 = vmatprep.subr.mxu0 0.0
    %402 = vmatpush1.xpose.msra.mxu0 0.0
    %403 = vmatprep.subr.mxu0 0.0
    %404 = vmatpush1.xpose.msra.mxu0 0.0
    %405 = vmatprep.subr.mxu0 0.0
    %406 = vmatpush1.xpose.msra.mxu0 0.0
    %407 = vmatprep.subr.mxu0 0.0
    %408 = vmatpush1.xpose.msra.mxu0 0.0
    %409 = vmatprep.subr.mxu0 0.0
    %410 = vmatpush1.xpose.msra.mxu0 0.0
    %411 = vmatprep.subr.mxu0 0.0
    %412 = vmatpush1.xpose.msra.mxu0 0.0
    %413 = vmatprep.subr.mxu0 0.0
    %414 = vmatpush1.xpose.msra.mxu0 0.0
    %415 = vmatprep.subr.mxu0 0.0
    %416 = vmatpush1.xpose.msra.mxu0 0.0
    %417 = vmatprep.mubr.f32.mxu0 0.0
    %418 = vmatmul.mubr.f32.gmra.mrb[0].mxu0 %v349
    %v419 = vpop.f32.mrb[0].mxu0
    %v420 = vadd.f32 0.0, %v419
    %v421 = vpop.f32.mrb[0].mxu0
    %422 = vdwg.mxu0
    %v423 = vsel %vm257, %v420, -inf
    %424 = vmax.xlane.f32.xlu0 %v423
    %v425 = vpop.xlane.xlu0 %424
    %v426 = vsub.f32 %v420, %v425
    %v427 = vmul.f32 %v426, 1.442695
    %v428 = vpow.pop %v427
    %v429 = vsel %vm257, %v428, 0.0
    %430 = vadd.xlane.f32.xlu0 %v429
    %v431 = vpop.xlane.xlu0 %430
    %v432 = vrcp.pop %v431
    %433 = vrot.lane.b32.xlu0 %v171, 48
    %v434 = vpop.permute.xlu0 %433
    %v437 = vsel %vm257, %v428, 0
    %439 = vmatprep.subr.mxu0 0.0
    %440 = vmatpush1.msra.mxu0 %v434
    %441 = vmatprep.subr.mxu0 0.0
    %442 = vmatpush1.msra.mxu0 0.0
    %443 = vmatprep.subr.mxu0 0.0
    %444 = vmatpush1.msra.mxu0 0.0
    %445 = vmatprep.subr.mxu0 0.0
    %446 = vmatpush1.msra.mxu0 0.0
    %447 = vmatprep.subr.mxu0 0.0
    %448 = vmatpush1.msra.mxu0 0.0
    %449 = vmatprep.subr.mxu0 0.0
    %450 = vmatpush1.msra.mxu0 0.0
    %451 = vmatprep.subr.mxu0 0.0
    %452 = vmatpush1.msra.mxu0 0.0
    %453 = vmatprep.subr.mxu0 0.0
    %454 = vmatpush1.msra.mxu0 0.0
    %455 = vmatprep.subr.mxu0 0.0
    %456 = vmatpush1.msra.mxu0 0.0
    %457 = vmatprep.subr.mxu0 0.0
    %458 = vmatpush1.msra.mxu0 0.0
    %459 = vmatprep.subr.mxu0 0.0
    %460 = vmatpush1.msra.mxu0 0.0
    %461 = vmatprep.subr.mxu0 0.0
    %462 = vmatpush1.msra.mxu0 0.0
    %463 = vmatprep.subr.mxu0 0.0
    %464 = vmatpush1.msra.mxu0 0.0
    %465 = vmatprep.subr.mxu0 0.0
    %466 = vmatpush1.msra.mxu0 0.0
    %467 = vmatprep.subr.mxu0 0.0
    %468 = vmatpush1.msra.mxu0 0.0
    %469 = vmatprep.subr.mxu0 0.0
    %470 = vmatpush1.msra.mxu0 0.0
    %471 = vmatprep.subr.mxu0 0.0
    %472 = vmatpush1.msra.mxu0 0.0
    %473 = vmatprep.subr.mxu0 0.0
    %474 = vmatpush1.msra.mxu0 0.0
    %475 = vmatprep.subr.mxu0 0.0
    %476 = vmatpush1.msra.mxu0 0.0
    %477 = vmatprep.subr.mxu0 0.0
    %478 = vmatpush1.msra.mxu0 0.0
    %479 = vmatprep.subr.mxu0 0.0
    %480 = vmatpush1.msra.mxu0 0.0
    %481 = vmatprep.subr.mxu0 0.0
    %482 = vmatpush1.msra.mxu0 0.0
    %483 = vmatprep.subr.mxu0 0.0
    %484 = vmatpush1.msra.mxu0 0.0
    %485 = vmatprep.subr.mxu0 0.0
    %486 = vmatpush1.msra.mxu0 0.0
    %487 = vmatprep.subr.mxu0 0.0
    %488 = vmatpush1.msra.mxu0 0.0
    %489 = vmatprep.subr.mxu0 0.0
    %490 = vmatpush1.msra.mxu0 0.0
    %491 = vmatprep.subr.mxu0 0.0
    %492 = vmatpush1.msra.mxu0 0.0
    %493 = vmatprep.subr.mxu0 0.0
    %494 = vmatpush1.msra.mxu0 0.0
    %495 = vmatprep.subr.mxu0 0.0
    %496 = vmatpush1.msra.mxu0 0.0
    %497 = vmatprep.subr.mxu0 0.0
    %498 = vmatpush1.msra.mxu0 0.0
    %499 = vmatprep.subr.mxu0 0.0
    %500 = vmatpush1.msra.mxu0 0.0
    %501 = vmatprep.subr.mxu0 0.0
    %502 = vmatpush1.msra.mxu0 0.0
    %503 = vmatprep.mubr.f32.mxu0 0.0
    %504 = vmatmul.mubr.f32.gmra.mrb[0].mxu0 %v437
    %v505 = vpop.f32.mrb[0].mxu0
    %v506 = vadd.f32 0.0, %v505
    %v507 = vpop.f32.mrb[0].mxu0
    %508 = vdwg.mxu0
    %v509 = vmul.f32 %v506, %v432
    %511 = vrot.lane.b32.xlu0 %v509, 16
    %v512 = vpop.permute.xlu0 %511
    %v514 = vsel %vm182, %v344, %v512
    %516 = vrot.lane.b32.xlu0 %v176, 96
    %v517 = vpop.permute.xlu0 %516
    %v518 = vsel %vm182, %v176, 0
    %v520 = vsel %vm182, %v517, 0
    %522 = vmatprep.subr.mxu0 0.0
    %523 = vmatpush1.xpose.msra.mxu0 %v520
    %524 = vmatprep.subr.mxu0 0.0
    %525 = vmatpush1.xpose.msra.mxu0 0.0
    %526 = vmatprep.subr.mxu0 0.0
    %527 = vmatpush1.xpose.msra.mxu0 0.0
    %528 = vmatprep.subr.mxu0 0.0
    %529 = vmatpush1.xpose.msra.mxu0 0.0
    %530 = vmatprep.subr.mxu0 0.0
    %531 = vmatpush1.xpose.msra.mxu0 0.0
    %532 = vmatprep.subr.mxu0 0.0
    %533 = vmatpush1.xpose.msra.mxu0 0.0
    %534 = vmatprep.subr.mxu0 0.0
    %535 = vmatpush1.xpose.msra.mxu0 0.0
    %536 = vmatprep.subr.mxu0 0.0
    %537 = vmatpush1.xpose.msra.mxu0 0.0
    %538 = vmatprep.subr.mxu0 0.0
    %539 = vmatpush1.xpose.msra.mxu0 0.0
    %540 = vmatprep.subr.mxu0 0.0
    %541 = vmatpush1.xpose.msra.mxu0 0.0
    %542 = vmatprep.subr.mxu0 0.0
    %543 = vmatpush1.xpose.msra.mxu0 0.0
    %544 = vmatprep.subr.mxu0 0.0
    %545 = vmatpush1.xpose.msra.mxu0 0.0
    %546 = vmatprep.subr.mxu0 0.0
    %547 = vmatpush1.xpose.msra.mxu0 0.0
    %548 = vmatprep.subr.mxu0 0.0
    %549 = vmatpush1.xpose.msra.mxu0 0.0
    %550 = vmatprep.subr.mxu0 0.0
    %551 = vmatpush1.xpose.msra.mxu0 0.0
    %552 = vmatprep.subr.mxu0 0.0
    %553 = vmatpush1.xpose.msra.mxu0 0.0
    %554 = vmatprep.subr.mxu0 0.0
    %555 = vmatpush1.xpose.msra.mxu0 0.0
    %556 = vmatprep.subr.mxu0 0.0
    %557 = vmatpush1.xpose.msra.mxu0 0.0
    %558 = vmatprep.subr.mxu0 0.0
    %559 = vmatpush1.xpose.msra.mxu0 0.0
    %560 = vmatprep.subr.mxu0 0.0
    %561 = vmatpush1.xpose.msra.mxu0 0.0
    %562 = vmatprep.subr.mxu0 0.0
    %563 = vmatpush1.xpose.msra.mxu0 0.0
    %564 = vmatprep.subr.mxu0 0.0
    %565 = vmatpush1.xpose.msra.mxu0 0.0
    %566 = vmatprep.subr.mxu0 0.0
    %567 = vmatpush1.xpose.msra.mxu0 0.0
    %568 = vmatprep.subr.mxu0 0.0
    %569 = vmatpush1.xpose.msra.mxu0 0.0
    %570 = vmatprep.subr.mxu0 0.0
    %571 = vmatpush1.xpose.msra.mxu0 0.0
    %572 = vmatprep.subr.mxu0 0.0
    %573 = vmatpush1.xpose.msra.mxu0 0.0
    %574 = vmatprep.subr.mxu0 0.0
    %575 = vmatpush1.xpose.msra.mxu0 0.0
    %576 = vmatprep.subr.mxu0 0.0
    %577 = vmatpush1.xpose.msra.mxu0 0.0
    %578 = vmatprep.subr.mxu0 0.0
    %579 = vmatpush1.xpose.msra.mxu0 0.0
    %580 = vmatprep.subr.mxu0 0.0
    %581 = vmatpush1.xpose.msra.mxu0 0.0
    %582 = vmatprep.subr.mxu0 0.0
    %583 = vmatpush1.xpose.msra.mxu0 0.0
    %584 = vmatprep.subr.mxu0 0.0
    %585 = vmatpush1.xpose.msra.mxu0 0.0
    %586 = vmatprep.mubr.f32.mxu0 0.0
    %587 = vmatmul.mubr.f32.gmra.mrb[0].mxu0 %v518
    %v588 = vpop.f32.mrb[0].mxu0
    %v589 = vadd.f32 0.0, %v588
    %v590 = vpop.f32.mrb[0].mxu0
    %591 = vdwg.mxu0
    %v592 = vsel %vm257, %v589, -inf
    %593 = vmax.xlane.f32.xlu0 %v592
    %v594 = vpop.xlane.xlu0 %593
    %v595 = vsub.f32 %v589, %v594
    %v596 = vmul.f32 %v595, 1.442695
    %v597 = vpow.pop %v596
    %v598 = vsel %vm257, %v597, 0.0
    %599 = vadd.xlane.f32.xlu0 %v598
    %v600 = vpop.xlane.xlu0 %599
    %v601 = vrcp.pop %v600
    %602 = vrot.lane.b32.xlu0 %v176, 64
    %v603 = vpop.permute.xlu0 %602
    %v606 = vsel %vm257, %v597, 0
    %608 = vmatprep.subr.mxu0 0.0
    %609 = vmatpush1.msra.mxu0 %v603
    %610 = vmatprep.subr.mxu0 0.0
    %611 = vmatpush1.msra.mxu0 0.0
    %612 = vmatprep.subr.mxu0 0.0
    %613 = vmatpush1.msra.mxu0 0.0
    %614 = vmatprep.subr.mxu0 0.0
    %615 = vmatpush1.msra.mxu0 0.0
    %616 = vmatprep.subr.mxu0 0.0
    %617 = vmatpush1.msra.mxu0 0.0
    %618 = vmatprep.subr.mxu0 0.0
    %619 = vmatpush1.msra.mxu0 0.0
    %620 = vmatprep.subr.mxu0 0.0
    %621 = vmatpush1.msra.mxu0 0.0
    %622 = vmatprep.subr.mxu0 0.0
    %623 = vmatpush1.msra.mxu0 0.0
    %624 = vmatprep.subr.mxu0 0.0
    %625 = vmatpush1.msra.mxu0 0.0
    %626 = vmatprep.subr.mxu0 0.0
    %627 = vmatpush1.msra.mxu0 0.0
    %628 = vmatprep.subr.mxu0 0.0
    %629 = vmatpush1.msra.mxu0 0.0
    %630 = vmatprep.subr.mxu0 0.0
    %631 = vmatpush1.msra.mxu0 0.0
    %632 = vmatprep.subr.mxu0 0.0
    %633 = vmatpush1.msra.mxu0 0.0
    %634 = vmatprep.subr.mxu0 0.0
    %635 = vmatpush1.msra.mxu0 0.0
    %636 = vmatprep.subr.mxu0 0.0
    %637 = vmatpush1.msra.mxu0 0.0
    %638 = vmatprep.subr.mxu0 0.0
    %639 = vmatpush1.msra.mxu0 0.0
    %640 = vmatprep.subr.mxu0 0.0
    %641 = vmatpush1.msra.mxu0 0.0
    %642 = vmatprep.subr.mxu0 0.0
    %643 = vmatpush1.msra.mxu0 0.0
    %644 = vmatprep.subr.mxu0 0.0
    %645 = vmatpush1.msra.mxu0 0.0
    %646 = vmatprep.subr.mxu0 0.0
    %647 = vmatpush1.msra.mxu0 0.0
    %648 = vmatprep.subr.mxu0 0.0
    %649 = vmatpush1.msra.mxu0 0.0
    %650 = vmatprep.subr.mxu0 0.0
    %651 = vmatpush1.msra.mxu0 0.0
    %652 = vmatprep.subr.mxu0 0.0
    %653 = vmatpush1.msra.mxu0 0.0
    %654 = vmatprep.subr.mxu0 0.0
    %655 = vmatpush1.msra.mxu0 0.0
    %656 = vmatprep.subr.mxu0 0.0
    %657 = vmatpush1.msra.mxu0 0.0
    %658 = vmatprep.subr.mxu0 0.0
    %659 = vmatpush1.msra.mxu0 0.0
    %660 = vmatprep.subr.mxu0 0.0
    %661 = vmatpush1.msra.mxu0 0.0
    %662 = vmatprep.subr.mxu0 0.0
    %663 = vmatpush1.msra.mxu0 0.0
    %664 = vmatprep.subr.mxu0 0.0
    %665 = vmatpush1.msra.mxu0 0.0
    %666 = vmatprep.subr.mxu0 0.0
    %667 = vmatpush1.msra.mxu0 0.0
    %668 = vmatprep.subr.mxu0 0.0
    %669 = vmatpush1.msra.mxu0 0.0
    %670 = vmatprep.subr.mxu0 0.0
    %671 = vmatpush1.msra.mxu0 0.0
    %672 = vmatprep.mubr.f32.mxu0 0.0
    %673 = vmatmul.mubr.f32.gmra.mrb[0].mxu0 %v606
    %v674 = vpop.f32.mrb[0].mxu0
    %v675 = vadd.f32 0.0, %v674
    %v676 = vpop.f32.mrb[0].mxu0
    %677 = vdwg.mxu0
    %v678 = vmul.f32 %v675, %v601
    %679 = vrot.lane.b32.xlu0 %v176, 112
    %v680 = vpop.permute.xlu0 %679
    %681 = vrot.lane.b32.xlu0 %v176, 80
    %v682 = vpop.permute.xlu0 %681
    %v683 = vsel %vm182, %v680, 0
    %v685 = vsel %vm182, %v682, 0
    %687 = vmatprep.subr.mxu0 0.0
    %688 = vmatpush1.xpose.msra.mxu0 %v685
    %689 = vmatprep.subr.mxu0 0.0
    %690 = vmatpush1.xpose.msra.mxu0 0.0
    %691 = vmatprep.subr.mxu0 0.0
    %692 = vmatpush1.xpose.msra.mxu0 0.0
    %693 = vmatprep.subr.mxu0 0.0
    %694 = vmatpush1.xpose.msra.mxu0 0.0
    %695 = vmatprep.subr.mxu0 0.0
    %696 = vmatpush1.xpose.msra.mxu0 0.0
    %697 = vmatprep.subr.mxu0 0.0
    %698 = vmatpush1.xpose.msra.mxu0 0.0
    %699 = vmatprep.subr.mxu0 0.0
    %700 = vmatpush1.xpose.msra.mxu0 0.0
    %701 = vmatprep.subr.mxu0 0.0
    %702 = vmatpush1.xpose.msra.mxu0 0.0
    %703 = vmatprep.subr.mxu0 0.0
    %704 = vmatpush1.xpose.msra.mxu0 0.0
    %705 = vmatprep.subr.mxu0 0.0
    %706 = vmatpush1.xpose.msra.mxu0 0.0
    %707 = vmatprep.subr.mxu0 0.0
    %708 = vmatpush1.xpose.msra.mxu0 0.0
    %709 = vmatprep.subr.mxu0 0.0
    %710 = vmatpush1.xpose.msra.mxu0 0.0
    %711 = vmatprep.subr.mxu0 0.0
    %712 = vmatpush1.xpose.msra.mxu0 0.0
    %713 = vmatprep.subr.mxu0 0.0
    %714 = vmatpush1.xpose.msra.mxu0 0.0
    %715 = vmatprep.subr.mxu0 0.0
    %716 = vmatpush1.xpose.msra.mxu0 0.0
    %717 = vmatprep.subr.mxu0 0.0
    %718 = vmatpush1.xpose.msra.mxu0 0.0
    %719 = vmatprep.subr.mxu0 0.0
    %720 = vmatpush1.xpose.msra.mxu0 0.0
    %721 = vmatprep.subr.mxu0 0.0
    %722 = vmatpush1.xpose.msra.mxu0 0.0
    %723 = vmatprep.subr.mxu0 0.0
    %724 = vmatpush1.xpose.msra.mxu0 0.0
    %725 = vmatprep.subr.mxu0 0.0
    %726 = vmatpush1.xpose.msra.mxu0 0.0
    %727 = vmatprep.subr.mxu0 0.0
    %728 = vmatpush1.xpose.msra.mxu0 0.0
    %729 = vmatprep.subr.mxu0 0.0
    %730 = vmatpush1.xpose.msra.mxu0 0.0
    %731 = vmatprep.subr.mxu0 0.0
    %732 = vmatpush1.xpose.msra.mxu0 0.0
    %733 = vmatprep.subr.mxu0 0.0
    %734 = vmatpush1.xpose.msra.mxu0 0.0
    %735 = vmatprep.subr.mxu0 0.0
    %736 = vmatpush1.xpose.msra.mxu0 0.0
    %737 = vmatprep.subr.mxu0 0.0
    %738 = vmatpush1.xpose.msra.mxu0 0.0
    %739 = vmatprep.subr.mxu0 0.0
    %740 = vmatpush1.xpose.msra.mxu0 0.0
    %741 = vmatprep.subr.mxu0 0.0
    %742 = vmatpush1.xpose.msra.mxu0 0.0
    %743 = vmatprep.subr.mxu0 0.0
    %744 = vmatpush1.xpose.msra.mxu0 0.0
    %745 = vmatprep.subr.mxu0 0.0
    %746 = vmatpush1.xpose.msra.mxu0 0.0
    %747 = vmatprep.subr.mxu0 0.0
    %748 = vmatpush1.xpose.msra.mxu0 0.0
    %749 = vmatprep.subr.mxu0 0.0
    %750 = vmatpush1.xpose.msra.mxu0 0.0
    %751 = vmatprep.mubr.f32.mxu0 0.0
    %752 = vmatmul.mubr.f32.gmra.mrb[0].mxu0 %v683
    %v753 = vpop.f32.mrb[0].mxu0
    %v754 = vadd.f32 0.0, %v753
    %v755 = vpop.f32.mrb[0].mxu0
    %756 = vdwg.mxu0
    %v757 = vsel %vm257, %v754, -inf
    %758 = vmax.xlane.f32.xlu0 %v757
    %v759 = vpop.xlane.xlu0 %758
    %v760 = vsub.f32 %v754, %v759
    %v761 = vmul.f32 %v760, 1.442695
    %v762 = vpow.pop %v761
    %v763 = vsel %vm257, %v762, 0.0
    %764 = vadd.xlane.f32.xlu0 %v763
    %v765 = vpop.xlane.xlu0 %764
    %v766 = vrcp.pop %v765
    %767 = vrot.lane.b32.xlu0 %v176, 48
    %v768 = vpop.permute.xlu0 %767
    %v771 = vsel %vm257, %v762, 0
    %773 = vmatprep.subr.mxu0 0.0
    %774 = vmatpush1.msra.mxu0 %v768
    %775 = vmatprep.subr.mxu0 0.0
    %776 = vmatpush1.msra.mxu0 0.0
    %777 = vmatprep.subr.mxu0 0.0
    %778 = vmatpush1.msra.mxu0 0.0
    %779 = vmatprep.subr.mxu0 0.0
    %780 = vmatpush1.msra.mxu0 0.0
    %781 = vmatprep.subr.mxu0 0.0
    %782 = vmatpush1.msra.mxu0 0.0
    %783 = vmatprep.subr.mxu0 0.0
    %784 = vmatpush1.msra.mxu0 0.0
    %785 = vmatprep.subr.mxu0 0.0
    %786 = vmatpush1.msra.mxu0 0.0
    %787 = vmatprep.subr.mxu0 0.0
    %788 = vmatpush1.msra.mxu0 0.0
    %789 = vmatprep.subr.mxu0 0.0
    %790 = vmatpush1.msra.mxu0 0.0
    %791 = vmatprep.subr.mxu0 0.0
    %792 = vmatpush1.msra.mxu0 0.0
    %793 = vmatprep.subr.mxu0 0.0
    %794 = vmatpush1.msra.mxu0 0.0
    %795 = vmatprep.subr.mxu0 0.0
    %796 = vmatpush1.msra.mxu0 0.0
    %797 = vmatprep.subr.mxu0 0.0
    %798 = vmatpush1.msra.mxu0 0.0
    %799 = vmatprep.subr.mxu0 0.0
    %800 = vmatpush1.msra.mxu0 0.0
    %801 = vmatprep.subr.mxu0 0.0
    %802 = vmatpush1.msra.mxu0 0.0
    %803 = vmatprep.subr.mxu0 0.0
    %804 = vmatpush1.msra.mxu0 0.0
    %805 = vmatprep.subr.mxu0 0.0
    %806 = vmatpush1.msra.mxu0 0.0
    %807 = vmatprep.subr.mxu0 0.0
    %808 = vmatpush1.msra.mxu0 0.0
    %809 = vmatprep.subr.mxu0 0.0
    %810 = vmatpush1.msra.mxu0 0.0
    %811 = vmatprep.subr.mxu0 0.0
    %812 = vmatpush1.msra.mxu0 0.0
    %813 = vmatprep.subr.mxu0 0.0
    %814 = vmatpush1.msra.mxu0 0.0
    %815 = vmatprep.subr.mxu0 0.0
    %816 = vmatpush1.msra.mxu0 0.0
    %817 = vmatprep.subr.mxu0 0.0
    %818 = vmatpush1.msra.mxu0 0.0
    %819 = vmatprep.subr.mxu0 0.0
    %820 = vmatpush1.msra.mxu0 0.0
    %821 = vmatprep.subr.mxu0 0.0
    %822 = vmatpush1.msra.mxu0 0.0
    %823 = vmatprep.subr.mxu0 0.0
    %824 = vmatpush1.msra.mxu0 0.0
    %825 = vmatprep.subr.mxu0 0.0
    %826 = vmatpush1.msra.mxu0 0.0
    %827 = vmatprep.subr.mxu0 0.0
    %828 = vmatpush1.msra.mxu0 0.0
    %829 = vmatprep.subr.mxu0 0.0
    %830 = vmatpush1.msra.mxu0 0.0
    %831 = vmatprep.subr.mxu0 0.0
    %832 = vmatpush1.msra.mxu0 0.0
    %833 = vmatprep.subr.mxu0 0.0
    %834 = vmatpush1.msra.mxu0 0.0
    %835 = vmatprep.subr.mxu0 0.0
    %836 = vmatpush1.msra.mxu0 0.0
    %837 = vmatprep.mubr.f32.mxu0 0.0
    %838 = vmatmul.mubr.f32.gmra.mrb[0].mxu0 %v771
    %v839 = vpop.f32.mrb[0].mxu0
    %v840 = vadd.f32 0.0, %v839
    %v841 = vpop.f32.mrb[0].mxu0
    %842 = vdwg.mxu0
    %v843 = vmul.f32 %v840, %v766
    %845 = vrot.lane.b32.xlu0 %v843, 16
    %v846 = vpop.permute.xlu0 %845
    %v848 = vsel %vm182, %v678, %v846
    %v849 = vld [vmem:[#allocation7] sm:$0xff]
    %v850 = vld [vmem:[#allocation7 + $0x8] sm:$0xff]
    %v851 = vld [vmem:[#allocation7 + $0x10] sm:$0xff]
    %v852 = vld [vmem:[#allocation7 + $0x18] sm:$0xff]
    %v854 = vsel %vm97, %v514, 0
    %v857 = vsel %vm97, %v848, 0
    %859 = vmatprep.subr.mxu0 0.0
    %860 = vmatpush1.msra.mxu0 %v849
    %861 = vmatprep.subr.mxu0 0.0
    %862 = vmatpush1.msra.mxu0 %v850
    %863 = vmatprep.subr.mxu0 0.0
    %864 = vmatpush1.msra.mxu0 %v851
    %865 = vmatprep.subr.mxu0 0.0
    %866 = vmatpush1.msra.mxu0 %v852
    %867 = vmatprep.subr.mxu0 0.0
    %868 = vmatpush1.msra.mxu0 0.0
    %869 = vmatprep.subr.mxu0 0.0
    %870 = vmatpush1.msra.mxu0 0.0
    %871 = vmatprep.subr.mxu0 0.0
    %872 = vmatpush1.msra.mxu0 0.0
    %873 = vmatprep.subr.mxu0 0.0
    %874 = vmatpush1.msra.mxu0 0.0
    %875 = vmatprep.subr.mxu0 0.0
    %876 = vmatpush1.msra.mxu0 0.0
    %877 = vmatprep.subr.mxu0 0.0
    %878 = vmatpush1.msra.mxu0 0.0
    %879 = vmatprep.subr.mxu0 0.0
    %880 = vmatpush1.msra.mxu0 0.0
    %881 = vmatprep.subr.mxu0 0.0
    %882 = vmatpush1.msra.mxu0 0.0
    %883 = vmatprep.subr.mxu0 0.0
    %884 = vmatpush1.msra.mxu0 0.0
    %885 = vmatprep.subr.mxu0 0.0
    %886 = vmatpush1.msra.mxu0 0.0
    %887 = vmatprep.subr.mxu0 0.0
    %888 = vmatpush1.msra.mxu0 0.0
    %889 = vmatprep.subr.mxu0 0.0
    %890 = vmatpush1.msra.mxu0 0.0
    %891 = vmatprep.subr.mxu0 0.0
    %892 = vmatpush1.msra.mxu0 0.0
    %893 = vmatprep.subr.mxu0 0.0
    %894 = vmatpush1.msra.mxu0 0.0
    %895 = vmatprep.subr.mxu0 0.0
    %896 = vmatpush1.msra.mxu0 0.0
    %897 = vmatprep.subr.mxu0 0.0
    %898 = vmatpush1.msra.mxu0 0.0
    %899 = vmatprep.subr.mxu0 0.0
    %900 = vmatpush1.msra.mxu0 0.0
    %901 = vmatprep.subr.mxu0 0.0
    %902 = vmatpush1.msra.mxu0 0.0
    %903 = vmatprep.subr.mxu0 0.0
    %904 = vmatpush1.msra.mxu0 0.0
    %905 = vmatprep.subr.mxu0 0.0
    %906 = vmatpush1.msra.mxu0 0.0
    %907 = vmatprep.subr.mxu0 0.0
    %908 = vmatpush1.msra.mxu0 0.0
    %909 = vmatprep.subr.mxu0 0.0
    %910 = vmatpush1.msra.mxu0 0.0
    %911 = vmatprep.subr.mxu0 0.0
    %912 = vmatpush1.msra.mxu0 0.0
    %913 = vmatprep.subr.mxu0 0.0
    %914 = vmatpush1.msra.mxu0 0.0
    %915 = vmatprep.subr.mxu0 0.0
    %916 = vmatpush1.msra.mxu0 0.0
    %917 = vmatprep.subr.mxu0 0.0
    %918 = vmatpush1.msra.mxu0 0.0
    %919 = vmatprep.subr.mxu0 0.0
    %920 = vmatpush1.msra.mxu0 0.0
    %921 = vmatprep.subr.mxu0 0.0
    %922 = vmatpush1.msra.mxu0 0.0
    %923 = vmatprep.mubr.f32.mxu0 0.0
    %924 = vmatmul.mubr.f32.gmra.mrb[0].mxu0 %v854
    %v925 = vpop.f32.mrb[0].mxu0
    %v926 = vadd.f32 0.0, %v925
    %v927 = vpop.f32.mrb[0].mxu0
    %928 = vmatprep.mubr.f32.mxu0 0.0
    %929 = vmatmul.mubr.f32.gmra.mrb[0].mxu0 %v857
    %v930 = vpop.f32.mrb[0].mxu0
    %v931 = vadd.f32 0.0, %v930
    %v932 = vpop.f32.mrb[0].mxu0
    %933 = vdwg.mxu0
    %v934 = vadd.f32 %v82, %v926
    %v935 = vadd.f32 %v84, %v931
    %v936 = vld [vmem:[%s4] sm:$0x1]
    %v938 = vlaneseq
    %v939 = vshrl.u32 %v938, 7
    %v940 = vsub.s32 0, %v939
    %v941 = vrot.slane %v936, %v940
    %v943 = vadd.f32 %v934, %v941
    %v944 = vadd.f32 %v935, %v941
    %v945 = vld [vmem:[#allocation8] sm:$0xff]
    %v946 = vld [vmem:[#allocation8 + $0x8] sm:$0xff]
    %v947 = vld [vmem:[#allocation8 + $0x10] sm:$0xff]
    %v948 = vld [vmem:[#allocation8 + $0x18] sm:$0xff]
    %v949 = vld [vmem:[%s6] sm:$0x1]
    %v951 = vlaneseq
    %v952 = vshrl.u32 %v951, 7
    %v953 = vsub.s32 0, %v952
    %v954 = vrot.slane %v949, %v953
    %v957 = vsel %vm97, %v943, 0
    %v960 = vsel %vm97, %v944, 0
    %962 = vmatprep.subr.mxu0 0.0
    %963 = vmatpush1.msra.mxu0 %v945
    %964 = vmatprep.subr.mxu0 0.0
    %965 = vmatpush1.msra.mxu0 %v946
    %966 = vmatprep.subr.mxu0 0.0
    %967 = vmatpush1.msra.mxu0 %v947
    %968 = vmatprep.subr.mxu0 0.0
    %969 = vmatpush1.msra.mxu0 %v948
    %970 = vmatprep.subr.mxu0 0.0
    %971 = vmatpush1.msra.mxu0 0.0
    %972 = vmatprep.subr.mxu0 0.0
    %973 = vmatpush1.msra.mxu0 0.0
    %974 = vmatprep.subr.mxu0 0.0
    %975 = vmatpush1.msra.mxu0 0.0
    %976 = vmatprep.subr.mxu0 0.0
    %977 = vmatpush1.msra.mxu0 0.0
    %978 = vmatprep.subr.mxu0 0.0
    %979 = vmatpush1.msra.mxu0 0.0
    %980 = vmatprep.subr.mxu0 0.0
    %981 = vmatpush1.msra.mxu0 0.0
    %982 = vmatprep.subr.mxu0 0.0
    %983 = vmatpush1.msra.mxu0 0.0
    %984 = vmatprep.subr.mxu0 0.0
    %985 = vmatpush1.msra.mxu0 0.0
    %986 = vmatprep.subr.mxu0 0.0
    %987 = vmatpush1.msra.mxu0 0.0
    %988 = vmatprep.subr.mxu0 0.0
    %989 = vmatpush1.msra.mxu0 0.0
    %990 = vmatprep.subr.mxu0 0.0
    %991 = vmatpush1.msra.mxu0 0.0
    %992 = vmatprep.subr.mxu0 0.0
    %993 = vmatpush1.msra.mxu0 0.0
    %994 = vmatprep.subr.mxu0 0.0
    %995 = vmatpush1.msra.mxu0 0.0
    %996 = vmatprep.subr.mxu0 0.0
    %997 = vmatpush1.msra.mxu0 0.0
    %998 = vmatprep.subr.mxu0 0.0
    %999 = vmatpush1.msra.mxu0 0.0
    %1000 = vmatprep.subr.mxu0 0.0
    %1001 = vmatpush1.msra.mxu0 0.0
    %1002 = vmatprep.subr.mxu0 0.0
    %1003 = vmatpush1.msra.mxu0 0.0
    %1004 = vmatprep.subr.mxu0 0.0
    %1005 = vmatpush1.msra.mxu0 0.0
    %1006 = vmatprep.subr.mxu0 0.0
    %1007 = vmatpush1.msra.mxu0 0.0
    %1008 = vmatprep.subr.mxu0 0.0
    %1009 = vmatpush1.msra.mxu0 0.0
    %1010 = vmatprep.subr.mxu0 0.0
    %1011 = vmatpush1.msra.mxu0 0.0
    %1012 = vmatprep.subr.mxu0 0.0
    %1013 = vmatpush1.msra.mxu0 0.0
    %1014 = vmatprep.subr.mxu0 0.0
    %1015 = vmatpush1.msra.mxu0 0.0
    %1016 = vmatprep.subr.mxu0 0.0
    %1017 = vmatpush1.msra.mxu0 0.0
    %1018 = vmatprep.subr.mxu0 0.0
    %1019 = vmatpush1.msra.mxu0 0.0
    %1020 = vmatprep.subr.mxu0 0.0
    %1021 = vmatpush1.msra.mxu0 0.0
    %1022 = vmatprep.subr.mxu0 0.0
    %1023 = vmatpush1.msra.mxu0 0.0
    %1024 = vmatprep.subr.mxu0 0.0
    %1025 = vmatpush1.msra.mxu0 0.0
    %1026 = vmatprep.mubr.f32.mxu0 0.0
    %1027 = vmatmul.mubr.f32.gmra.mrb[0].mxu0 %v957
    %v1028 = vpop.f32.mrb[0].mxu0
    %v1029 = vadd.f32 %v954, %v1028
    %v1030 = vpop.f32.mrb[0].mxu0
    %1031 = vmatprep.mubr.f32.mxu0 0.0
    %1032 = vmatmul.mubr.f32.gmra.mrb[0].mxu0 %v960
    %v1033 = vpop.f32.mrb[0].mxu0
    %v1034 = vadd.f32 %v954, %v1033
    %v1035 = vpop.f32.mrb[0].mxu0
    %1036 = vdwg.mxu0
    %v1037 = vadd.f32 %v83, %v1029
    %v1038 = vadd.f32 %v85, %v1034
    %1039 = vst.msk [vmem:[#allocation10] sm:$0xff] %vm97, %v943
    %1040 = vst.msk [vmem:[#allocation10 + $0x8] sm:$0xff] %vm97, %v1037
    %1041 = vst.msk [vmem:[#allocation10 + $0x10] sm:$0xff] %vm97, %v944
    %1042 = vst.msk [vmem:[#allocation10 + $0x18] sm:$0xff] %vm97, %v1038
    // Predicated region
    $region46: #{reversible_attention.1} parent=1 // pred_check
      _
    $region47: #{reversible_attention.1} parent=1 // pred_check_branch
      %1044 = sbr.rel (0) target = $region49
    $region48: #{reversible_attention.1} parent=1 // pred_region
      %s1046 = ssub.s32 512, 512
      %1047 = vsyncadd [#allocation4], %s1046
      %s1048 = sshll.u32 [#allocation10], 4
      %s1049 = int_to_ptr.vmem [resolvable:$true] %s1048
      %1054 = dma.vmem_to_hbm [thread:$0]  %s1049, 512, %s7, [#allocation4], 128, 128, 8
    $region49: #{reversible_attention.1} parent=1 // pred_fallthru
      _
    // Predicated region
    $region50: #{reversible_attention.1} parent=1 // pred_check
      _
    $region51: #{reversible_attention.1} parent=1 // pred_check_branch
      %1056 = sbr.rel (0) target = $region53
    $region52: #{reversible_attention.1} parent=1 // pred_region
      %1057 = dma.done [#allocation4], 512
    $region53: #{reversible_attention.1} parent=1 // pred_fallthru
      _
    %1058 = vsyncpa [#allocation3], 1
    %1059 = vsyncpa [#allocation6], 1
    %1060 = vsyncpa [#allocation9], 1
    %1061 = vsyncpa [#allocation4], 1

</llo_original>
